<compile_context>
chip_gen: v7x
topology: tpu7x:2x2x1
jax: 0.10.0
libtpu: 0.0.40
codegen_flags: <defaults>
</compile_context>

<pallas_src>
import functools
from types import SimpleNamespace

import jax
import jax.numpy as jnp
from jax import lax
from jax.experimental import pallas as pl
from jax.experimental.pallas import tpu as pltpu


def _pick_tile(dim, quantum, target):
    """Largest divisor of `dim` that is a multiple of `quantum` and <= target.

    Falls back to the full dim (always a legal Mosaic block extent)."""
    if dim <= target:
        return dim
    t = (target // quantum) * quantum
    while t >= quantum:
        if dim % t == 0:
            return t
        t -= quantum
    return dim


def _vmem_budget():
    """Per-generation VMEM budget: ~96 MiB on v5e/v6e (128 MiB physical),
    ~48 MiB on v7x (64 MiB physical).  Conservative fallback if the query
    is unavailable."""
    try:
        cap = int(pltpu.get_tpu_info().vmem_capacity_bytes)
    except Exception:
        cap = 64 * 1024 * 1024
    return min(96 * 1024 * 1024, (cap * 3) // 4)


# ----------------------------------------------------------------------------
# Weighted 2-class cross-entropy (torch.nn.CrossEntropyLoss(weight=[10.0, 2.5]))
# ----------------------------------------------------------------------------
def _ce_kernel(logit_ref, lab_ref, out_ref, acc_num, acc_den, *, w0, w1):
    j = pl.program_id(1)

    @pl.when(j == 0)
    def _():
        acc_num[...] = jnp.zeros_like(acc_num)
        acc_den[...] = jnp.zeros_like(acc_den)

    z0 = logit_ref[0, 0].astype(jnp.float32)       # (tr, lanes) class-0 logits
    z1 = logit_ref[0, 1].astype(jnp.float32)       # (tr, lanes) class-1 logits
    lab = lab_ref[0]                               # (tr, lanes) int32 labels
    is0 = lab == 0

    # 2-class closed form: lse - z_y = softplus(z_other - z_y) (stable form)
    x = jnp.where(is0, z1 - z0, z0 - z1)
    nll = jnp.maximum(x, 0.0) + jnp.log(1.0 + jnp.exp(-jnp.abs(x)))
    w = jnp.where(is0, jnp.float32(w0), jnp.float32(w1))

    # pure element-wise accumulation; cross-lane reduce happens once at the end
    acc_num[...] += w * nll
    acc_den[...] += w

    @pl.when(j == pl.num_programs(1) - 1)
    def _():
        num = jnp.sum(acc_num[...])
        den = jnp.sum(acc_den[...])
        lane = lax.broadcasted_iota(jnp.int32, (1, 8, 128), 2)
        out_ref[...] = jnp.where(lane == 0, num,
                                 jnp.where(lane == 1, den, 0.0)).astype(jnp.float32)


def weighted_binary_ce(logits, labels, w0=10.0, w1=2.5):
    n, c2, h, w = logits.shape
    assert c2 == 2
    p = h * w
    if labels.dtype != jnp.int32:
        labels = labels.astype(jnp.int32)

    # flatten H*W into a lane-dense pixel axis (metadata-only reshape)
    if p % 128 == 0:
        lanes, rows = 128, p // 128
    else:
        lanes, rows = p, 1
    lg = logits.reshape(n, 2, rows, lanes)         # native dtype, no extra HBM pass
    lb = labels.reshape(n, rows, lanes)

    budget = _vmem_budget()
    itemsize = jnp.dtype(logits.dtype).itemsize
    # target ~2 MiB logits blocks (>=85% of HBM roofline in tile sweeps)
    tr_target = max(8, (2 << 20) // max(1, lanes * 2 * itemsize))
    tr = _pick_tile(rows, 8, tr_target)
    n_rt = rows // tr

    out = pl.pallas_call(
        functools.partial(_ce_kernel, w0=float(w0), w1=float(w1)),
        out_shape=jax.ShapeDtypeStruct((n, 8, 128), jnp.float32),
        grid=(n, n_rt),
        in_specs=[
            pl.BlockSpec((1, 2, tr, lanes), lambda i, j: (i, 0, j, 0)),
            pl.BlockSpec((1, tr, lanes), lambda i, j: (i, j, 0)),
        ],
        out_specs=pl.BlockSpec((1, 8, 128), lambda i, j: (i, 0, 0)),
        scratch_shapes=[pltpu.VMEM((tr, lanes), jnp.float32),
                        pltpu.VMEM((tr, lanes), jnp.float32)],
        compiler_params=pltpu.CompilerParams(
            dimension_semantics=("parallel", "arbitrary"),
            vmem_limit_bytes=budget),
    )(lg, lb)

    num = jnp.sum(out[:, 0, 0])
    den = jnp.sum(out[:, 0, 1])
    return num / den


# ----------------------------------------------------------------------------
# Discriminative (push-pull) lane embedding loss
# ----------------------------------------------------------------------------
def _gather_segment_means(muT, onehot, K):
    """Per-pixel mean gather: (C, K) means x (K, P) one-hot -> (C, P)."""
    if K <= 4:   # small K: unrolled VPU selects, avoid an MXU drain
        mu_ext = muT[:, 0:1] * onehot[0:1, :]
        for k in range(1, K):
            mu_ext = mu_ext + muT[:, k:k + 1] * onehot[k:k + 1, :]
        return mu_ext
    return lax.dot_general(muT, onehot, (((1,), (0,)), ((), ())),
                           preferred_element_type=jnp.float32)


def _disc_finalize(muT, cntKK, d_sum, *, K, delta_d, p_var, p_dist, p_reg):
    """Produce the (1, 8, 128) output lane vector [var, dist, reg, 0...].

    muT:   (C, K) per-segment means (zero columns for absent ids)
    cntKK: (K, K) diagonal matrix of per-segment pixel counts
    d_sum: scalar sum over pixels of clamp(||x - mu|| - delta_v, 0)^2

    NOTE: the reference divides the (K,)-shaped per-segment distance sums by
    the (K, 1)-shaped counts, broadcasting to (K, K) before torch.mean, hence
    l_var = (sum_p d_p) * (sum_k 1/N_k) / K_eff^2 (verified against loss.py).
    Absent ids are excluded, matching torch.unique."""
    cnt_row = jnp.sum(cntKK, axis=0, keepdims=True)               # (1, K)
    cnt_col = jnp.sum(cntKK, axis=1, keepdims=True)               # (K, 1)
    pres_row = (cnt_row > 0.0).astype(jnp.float32)
    pres_col = (cnt_col > 0.0).astype(jnp.float32)
    k_eff = jnp.maximum(jnp.sum(pres_row), 1.0)

    inv_counts = pres_row / jnp.maximum(cnt_row, 1.0)
    l_var = d_sum * jnp.sum(inv_counts) / (k_eff * k_eff)

    # pairwise push term via the (K, K) Gram matrix of the means
    gram = lax.dot_general(muT, muT, (((0,), (0,)), ((), ())),
                           preferred_element_type=jnp.float32)    # (K, K)
    eye = (lax.broadcasted_iota(jnp.int32, (K, K), 0)
           == lax.broadcasted_iota(jnp.int32, (K, K), 1))
    diag = jnp.where(eye, gram, 0.0)
    sq_col = jnp.sum(diag, axis=1, keepdims=True)                 # (K, 1) ||mu_a||^2
    sq_row = jnp.sum(diag, axis=0, keepdims=True)                 # (1, K) ||mu_b||^2
    dist2 = jnp.maximum(sq_col + sq_row - 2.0 * gram, 0.0)
    pair_ok = pres_col * pres_row                                 # both ids present
    mask = jnp.where(jnp.logical_and(dist2 > 0.0, jnp.logical_not(eye)),
                     pair_ok, 0.0)
    pd = jnp.maximum(2.0 * delta_d - jnp.sqrt(dist2), 0.0)
    pd = pd * pd * mask
    # torch.mean over an empty pair set is NaN; clamp to 0 instead (graceful)
    l_dist = jnp.sum(pd) / jnp.maximum(jnp.sum(mask), 1.0)

    l_reg = jnp.sum(jnp.sqrt(sq_row) * pres_row) / k_eff

    lane = lax.broadcasted_iota(jnp.int32, (1, 8, 128), 2)
    return jnp.where(
        lane == 0, p_var * l_var,
        jnp.where(lane == 1, p_dist * l_dist,
                  jnp.where(lane == 2, p_reg * l_reg, 0.0))).astype(jnp.float32)


def _disc_resident_kernel(feat_ref, lab_ref, out_ref, *, K, delta_v, delta_d,
                          p_var, p_dist, p_reg):
    """Single pass: the whole (C, P) slab is resident in VMEM."""
    feat = feat_ref[0].astype(jnp.float32)                        # (C, P)
    lab = lab_ref[0]                                              # (1, P)
    P = feat.shape[1]

    seg_iota = lax.broadcasted_iota(jnp.int32, (K, P), 0)
    onehot = (lab == seg_iota).astype(jnp.float32)                # (K, P)

    # per-segment feature sums + diagonal count matrix (MXU contractions over P)
    seg_sum = lax.dot_general(feat, onehot, (((1,), (1,)), ((), ())),
                              preferred_element_type=jnp.float32)      # (C, K)
    cntKK = lax.dot_general(onehot, onehot, (((1,), (1,)), ((), ())),
                            preferred_element_type=jnp.float32)        # (K, K)
    cnt_row = jnp.sum(cntKK, axis=0, keepdims=True)
    muT = seg_sum / jnp.maximum(cnt_row, 1.0)                     # zeros for absent ids

    mu_ext = _gather_segment_means(muT, onehot, K)                # (C, P)
    diff = mu_ext - feat
    dist = jnp.sqrt(jnp.sum(diff * diff, axis=0, keepdims=True))  # (1, P)
    dclip = jnp.maximum(dist - delta_v, 0.0)
    d_sum = jnp.sum(dclip * dclip)

    out_ref[...] = _disc_finalize(muT, cntKK, d_sum, K=K, delta_d=delta_d,
                                  p_var=p_var, p_dist=p_dist, p_reg=p_reg)


def _disc_stream_kernel(feat_ref, lab_ref, out_ref, seg_acc, cnt_acc, d_acc, *,
                        K, delta_v, delta_d, p_var, p_dist, p_reg, n_ptiles):
    """Streamed fallback: grid=(B, phase, P/tP), 2 passes over the pixels."""
    ph = pl.program_id(1)
    pj = pl.program_id(2)

    feat = feat_ref[0].astype(jnp.float32)                        # (C, tP)
    lab = lab_ref[0]                                              # (1, tP)
    tP = feat.shape[1]
    seg_iota = lax.broadcasted_iota(jnp.int32, (K, tP), 0)
    onehot = (lab == seg_iota).astype(jnp.float32)

    # ---- phase 0: per-segment feature sums & counts ------------------------
    @pl.when(ph == 0)
    def _():
        @pl.when(pj == 0)
        def _():
            seg_acc[...] = jnp.zeros_like(seg_acc)
            cnt_acc[...] = jnp.zeros_like(cnt_acc)
            d_acc[...] = jnp.zeros_like(d_acc)

        seg_acc[...] += lax.dot_general(
            feat, onehot, (((1,), (1,)), ((), ())),
            preferred_element_type=jnp.float32)                   # (C, K)
        cnt_acc[...] += lax.dot_general(
            onehot, onehot, (((1,), (1,)), ((), ())),
            preferred_element_type=jnp.float32)                   # (K, K) diag

        @pl.when(pj == n_ptiles - 1)
        def _():
            cnt_row = jnp.sum(cnt_acc[...], axis=0, keepdims=True)
            seg_acc[...] = seg_acc[...] / jnp.maximum(cnt_row, 1.0)  # reuse as means

    # ---- phase 1: pull (variance) term + finalize ---------------------------
    @pl.when(ph == 1)
    def _():
        muT = seg_acc[...]                                        # (C, K) means
        mu_ext = _gather_segment_means(muT, onehot, K)
        diff = mu_ext - feat
        dist = jnp.sqrt(jnp.sum(diff * diff, axis=0, keepdims=True))
        dclip = jnp.maximum(dist - delta_v, 0.0)
        d_acc[...] += jnp.sum(dclip * dclip)                      # scalar broadcast acc

        @pl.when(pj == n_ptiles - 1)
        def _():
            d_sum = jnp.sum(d_acc[0:1, 0:1])
            out_ref[...] = _disc_finalize(muT, cnt_acc[...], d_sum, K=K,
                                          delta_d=delta_d, p_var=p_var,
                                          p_dist=p_dist, p_reg=p_reg)


def discriminative_loss(feat, label, *, K, delta_v, delta_d,
                        param_var, param_dist, param_reg, force_streamed=False):
    b, c, w, h = feat.shape
    p = w * h
    # trailing-dim merges only -> metadata reshapes, no extra HBM pass
    feat_r = feat.reshape(b, c, p)                 # native dtype (f32 or bf16)
    lab_r = label.reshape(b, 1, p)
    if lab_r.dtype != jnp.int32:
        lab_r = lab_r.astype(jnp.int32)

    budget = _vmem_budget()
    fbytes = jnp.dtype(feat.dtype).itemsize
    # conservative per-pixel VMEM estimate: double-buffered input block
    # (feat + labels) plus in-kernel temporaries (onehot, f32 feat, mu_ext, diff, dist)
    per_px = 2 * (c * fbytes + 4) + 4 * (K + 3 * c + 2)
    resident = (not force_streamed) and per_px * p <= (budget * 6) // 10

    kw = dict(K=K, delta_v=float(delta_v), delta_d=float(delta_d),
              p_var=float(param_var), p_dist=float(param_dist),
              p_reg=float(param_reg))

    if resident:
        per_b = pl.pallas_call(
            functools.partial(_disc_resident_kernel, **kw),
            out_shape=jax.ShapeDtypeStruct((b, 8, 128), jnp.float32),
            grid=(b,),
            in_specs=[pl.BlockSpec((1, c, p), lambda i: (i, 0, 0)),
                      pl.BlockSpec((1, 1, p), lambda i: (i, 0, 0))],
            out_specs=pl.BlockSpec((1, 8, 128), lambda i: (i, 0, 0)),
            compiler_params=pltpu.CompilerParams(
                dimension_semantics=("parallel",),
                vmem_limit_bytes=budget),
        )(feat_r, lab_r)
    else:
        # streamed 2-phase path with ~2 MiB feature tiles
        tp_target = max(512, ((budget * 4) // 10) // per_px)
        tp_target = max(128, (tp_target // 128) * 128)
        tp = _pick_tile(p, 128, tp_target)
        n_pt = p // tp
        per_b = pl.pallas_call(
            functools.partial(_disc_stream_kernel, n_ptiles=n_pt, **kw),
            out_shape=jax.ShapeDtypeStruct((b, 8, 128), jnp.float32),
            grid=(b, 2, n_pt),
            in_specs=[pl.BlockSpec((1, c, tp), lambda i, s, j: (i, 0, j)),
                      pl.BlockSpec((1, 1, tp), lambda i, s, j: (i, 0, j))],
            out_specs=pl.BlockSpec((1, 8, 128), lambda i, s, j: (i, 0, 0)),
            scratch_shapes=[
                pltpu.VMEM((c, K), jnp.float32),    # segment sums -> means
                pltpu.VMEM((K, K), jnp.float32),    # diagonal count matrix
                pltpu.VMEM((1, 128), jnp.float32),  # clamped-distance scalar acc
            ],
            compiler_params=pltpu.CompilerParams(
                dimension_semantics=("parallel", "arbitrary", "arbitrary"),
                vmem_limit_bytes=budget),
        )(feat_r, lab_r)

    l_var_res = jnp.sum(per_b[:, 0, 0])
    l_dist_res = jnp.sum(per_b[:, 0, 1])
    l_reg_res = jnp.sum(per_b[:, 0, 2])
    loss_res = l_var_res + l_dist_res + l_reg_res
    return loss_res / b, l_var_res / b, l_dist_res / b, l_reg_res / b


# ----------------------------------------------------------------------------
# LaneLoss wrapper (glue in plain JAX)
# ----------------------------------------------------------------------------
class LaneLossPallas:
    def __init__(self, opt):
        self.opt = opt
        # CrossEntropyLoss weight = [10.0, 2.5] (deterministic, from __init__)
        self.w0, self.w1 = 10.0, 2.5

    def __call__(self, outputs, batch):
        opt = self.opt
        ns = opt.num_stacks
        binary_loss = 0.0
        seg_loss = 0.0
        seg_loss_var = 0.0
        seg_loss_dist = 0.0
        seg_loss_reg = 0.0
        for s in range(ns):
            output = outputs[s]
            binary_loss += weighted_binary_ce(
                output['binary'], batch['binary'], self.w0, self.w1) / ns

            loss_total, loss_var, loss_dist, loss_reg = discriminative_loss(
                output['segmentation'], batch['segmentation'],
                K=opt.max_instances,
                delta_v=opt.delta_v, delta_d=opt.delta_d,
                param_var=opt.lane_loss_var_scale,
                param_dist=opt.lane_loss_dist_scale,
                param_reg=opt.lane_loss_reg_scale)
            seg_loss_var += loss_var / ns
            seg_loss_dist += loss_dist / ns
            seg_loss_reg += loss_reg / ns
            seg_loss += loss_total / ns

        loss = seg_loss + 6.0 * binary_loss
        loss_stats = {
            'loss': loss,
            'seg_loss': seg_loss,
            'binary_loss': binary_loss,
            'seg_var_loss': seg_loss_var,
            'seg_dist_loss': seg_loss_dist,
            'seg_reg_loss': seg_loss_reg,
        }
        return loss, loss_stats


if __name__ == "__main__":
    key = jax.random.PRNGKey(0)
    b, C, H, W = 2, 4, 16, 16          # small synthetic shapes
    K = 4                               # number of lane instances (incl. background)

    opt = SimpleNamespace(
        num_stacks=1,
        delta_v=0.5,
        delta_d=3.0,
        lane_emdebing_dim=C,
        lane_loss_scale=1.0,
        lane_loss_var_scale=1.0,
        lane_loss_dist_scale=1.0,
        lane_loss_reg_scale=0.001,
        max_instances=K,
    )

    k1, k2, k3, k4 = jax.random.split(key, 4)
    binary_logits = jax.random.normal(k1, (b, 2, H, W), dtype=jnp.float32)
    binary_label = jax.random.randint(k2, (b, H, W), 0, 2, dtype=jnp.int32)
    seg_feat = jax.random.normal(k3, (b, C, H, W), dtype=jnp.float32)

    seg_label = jax.random.randint(k4, (b, H * W), 0, K, dtype=jnp.int32)
    # guarantee every instance id 0..K-1 appears in each batch element
    seg_label = seg_label.at[:, :K].set(jnp.arange(K, dtype=jnp.int32))
    seg_label = seg_label.reshape(b, H, W)

    outputs = [{'binary': binary_logits, 'segmentation': seg_feat}]
    batch = {'binary': binary_label, 'segmentation': seg_label}

    loss_fn = LaneLossPallas(opt)
    loss, stats = loss_fn(outputs, batch)          # CE + resident disc path
    jax.block_until_ready(loss)
    jax.block_until_ready(stats['seg_loss'])

    # also exercise the streamed (tiled, 2-phase) fallback path once
    streamed = discriminative_loss(
        seg_feat, seg_label, K=K, delta_v=opt.delta_v, delta_d=opt.delta_d,
        param_var=opt.lane_loss_var_scale, param_dist=opt.lane_loss_dist_scale,
        param_reg=opt.lane_loss_reg_scale, force_streamed=True)
    jax.block_until_ready(streamed[0])

    print("KERNEL_OK")
</pallas_src>

<mosaic_0001>
module attributes {stable_mosaic.version = 11 : i64} {
  func.func @_ce_kernel(%arg0: i32, %arg1: i32, %arg2: memref<1x2x2x128xf32, #tpu.memory_space<vmem>>, %arg3: memref<1x2x128xi32, #tpu.memory_space<vmem>>, %arg4: memref<1x8x128xf32, #tpu.memory_space<vmem>>, %arg5: memref<2x128xf32, #tpu.memory_space<vmem>>, %arg6: memref<2x128xf32, #tpu.memory_space<vmem>>) attributes {dimension_semantics = [#tpu.dimension_semantics<parallel>, #tpu.dimension_semantics<arbitrary>], iteration_bounds = array<i64: 2, 1>, scalar_prefetch = 0 : i64, scratch_operands = 2 : i64, tpu.core_type = #tpu.core_type<tc>, window_params = [{transform_indices = @transform_0, window_bounds = array<i64: 1, 2, 2, 128>}, {transform_indices = @transform_1, window_bounds = array<i64: 1, 2, 128>}, {transform_indices = @transform_2, window_bounds = array<i64: 1, 8, 128>}]} {
    %c0_i32 = arith.constant 0 : i32
    %0 = arith.cmpi eq, %arg1, %c0_i32 : i32
    %1 = arith.extui %0 : i1 to i32
    %c0_i32_0 = arith.constant 0 : i32
    %2 = arith.cmpi ne, %1, %c0_i32_0 : i32
    scf.if %2 {
      %cst_25 = arith.constant 0.000000e+00 : f32
      %37 = vector.broadcast %cst_25 : f32 to vector<2x128xf32>
      %c0_26 = arith.constant 0 : index
      %c0_27 = arith.constant 0 : index
      %38 = vector.load %arg5[%c0_26, %c0_27] : memref<2x128xf32, #tpu.memory_space<vmem>>, vector<2x128xf32>
      tpu.vector_store %arg5[%c0_26, %c0_27], %37 {strides = array<i32>} : memref<2x128xf32, #tpu.memory_space<vmem>>, vector<2x128xf32>,
      %cst_28 = arith.constant 0.000000e+00 : f32
      %39 = vector.broadcast %cst_28 : f32 to vector<2x128xf32>
      %c0_29 = arith.constant 0 : index
      %c0_30 = arith.constant 0 : index
      %40 = vector.load %arg6[%c0_29, %c0_30] : memref<2x128xf32, #tpu.memory_space<vmem>>, vector<2x128xf32>
      tpu.vector_store %arg6[%c0_29, %c0_30], %39 {strides = array<i32>} : memref<2x128xf32, #tpu.memory_space<vmem>>, vector<2x128xf32>,
    } else {
    }
    %c0 = arith.constant 0 : index
    %c0_1 = arith.constant 0 : index
    %c0_2 = arith.constant 0 : index
    %c0_3 = arith.constant 0 : index
    %3 = vector.load %arg2[%c0, %c0_1, %c0_2, %c0_3] : memref<1x2x2x128xf32, #tpu.memory_space<vmem>>, vector<1x1x2x128xf32>
    %4 = vector.shape_cast %3 : vector<1x1x2x128xf32> to vector<2x128xf32>
    %c0_4 = arith.constant 0 : index
    %c1 = arith.constant 1 : index
    %c0_5 = arith.constant 0 : index
    %c0_6 = arith.constant 0 : index
    %5 = vector.load %arg2[%c0_4, %c1, %c0_5, %c0_6] : memref<1x2x2x128xf32, #tpu.memory_space<vmem>>, vector<1x1x2x128xf32>
    %6 = vector.shape_cast %5 : vector<1x1x2x128xf32> to vector<2x128xf32>
    %c0_7 = arith.constant 0 : index
    %c0_8 = arith.constant 0 : index
    %c0_9 = arith.constant 0 : index
    %7 = vector.load %arg3[%c0_7, %c0_8, %c0_9] : memref<1x2x128xi32, #tpu.memory_space<vmem>>, vector<1x2x128xi32>
    %8 = vector.shape_cast %7 : vector<1x2x128xi32> to vector<2x128xi32>
    %c0_i32_10 = arith.constant 0 : i32
    %9 = vector.broadcast %c0_i32_10 : i32 to vector<2x128xi32>
    %10 = arith.cmpi eq, %8, %9 : vector<2x128xi32>
    %11 = arith.subf %6, %4 : vector<2x128xf32>
    %12 = arith.subf %4, %6 : vector<2x128xf32>
    %13 = arith.select %10, %11, %12 : vector<2x128xi1>, vector<2x128xf32>
    %cst = arith.constant 0.000000e+00 : f32
    %14 = vector.broadcast %cst : f32 to vector<2x128xf32>
    %15 = arith.maximumf %13, %14 : vector<2x128xf32>
    %16 = math.absf %13 : vector<2x128xf32>
    %cst_11 = arith.constant 0.000000e+00 : f32
    %17 = vector.broadcast %cst_11 : f32 to vector<2x128xf32>
    %18 = arith.subf %17, %16 : vector<2x128xf32>
    %19 = math.exp %18 : vector<2x128xf32>
    %cst_12 = arith.constant 1.000000e+00 : f32
    %20 = vector.broadcast %cst_12 : f32 to vector<2x128xf32>
    %21 = arith.addf %20, %19 : vector<2x128xf32>
    %22 = math.log %21 : vector<2x128xf32>
    %23 = arith.addf %15, %22 : vector<2x128xf32>
    %cst_13 = arith.constant 1.000000e+01 : f32
    %cst_14 = arith.constant 2.500000e+00 : f32
    %24 = vector.broadcast %cst_13 : f32 to vector<2x128xf32>
    %25 = vector.broadcast %cst_14 : f32 to vector<2x128xf32>
    %26 = arith.select %10, %24, %25 : vector<2x128xi1>, vector<2x128xf32>
    %c0_15 = arith.constant 0 : index
    %c0_16 = arith.constant 0 : index
    %27 = vector.load %arg5[%c0_15, %c0_16] : memref<2x128xf32, #tpu.memory_space<vmem>>, vector<2x128xf32>
    %28 = arith.mulf %26, %23 : vector<2x128xf32>
    %29 = arith.addf %27, %28 : vector<2x128xf32>
    %c0_17 = arith.constant 0 : index
    %c0_18 = arith.constant 0 : index
    %30 = vector.load %arg5[%c0_17, %c0_18] : memref<2x128xf32, #tpu.memory_space<vmem>>, vector<2x128xf32>
    tpu.vector_store %arg5[%c0_17, %c0_18], %29 {strides = array<i32>} : memref<2x128xf32, #tpu.memory_space<vmem>>, vector<2x128xf32>,
    %c0_19 = arith.constant 0 : index
    %c0_20 = arith.constant 0 : index
    %31 = vector.load %arg6[%c0_19, %c0_20] : memref<2x128xf32, #tpu.memory_space<vmem>>, vector<2x128xf32>
    %32 = arith.addf %31, %26 : vector<2x128xf32>
    %c0_21 = arith.constant 0 : index
    %c0_22 = arith.constant 0 : index
    %33 = vector.load %arg6[%c0_21, %c0_22] : memref<2x128xf32, #tpu.memory_space<vmem>>, vector<2x128xf32>
    tpu.vector_store %arg6[%c0_21, %c0_22], %32 {strides = array<i32>} : memref<2x128xf32, #tpu.memory_space<vmem>>, vector<2x128xf32>,
    %c0_i32_23 = arith.constant 0 : i32
    %34 = arith.cmpi eq, %arg1, %c0_i32_23 : i32
    %35 = arith.extui %34 : i1 to i32
    %c0_i32_24 = arith.constant 0 : i32
    %36 = arith.cmpi ne, %35, %c0_i32_24 : i32
    scf.if %36 {
      %c0_25 = arith.constant 0 : index
      %c0_26 = arith.constant 0 : index
      %37 = vector.load %arg5[%c0_25, %c0_26] : memref<2x128xf32, #tpu.memory_space<vmem>>, vector<2x128xf32>
      %38 = vector.shape_cast %37 : vector<2x128xf32> to vector<1x2x128xf32>
      %cst_27 = arith.constant dense<0.000000e+00> : vector<1xf32>
      %39 = vector.multi_reduction <add>, %38, %cst_27 [1, 2] : vector<1x2x128xf32> to vector<1xf32>
      %40 = vector.shape_cast %39 : vector<1xf32> to vector<1x1x1xf32>
      %41 = vector.extract %40[0, 0, 0] : f32 from vector<1x1x1xf32>
      %c0_28 = arith.constant 0 : index
      %c0_29 = arith.constant 0 : index
      %42 = vector.load %arg6[%c0_28, %c0_29] : memref<2x128xf32, #tpu.memory_space<vmem>>, vector<2x128xf32>
      %43 = vector.shape_cast %42 : vector<2x128xf32> to vector<1x2x128xf32>
      %cst_30 = arith.constant dense<0.000000e+00> : vector<1xf32>
      %44 = vector.multi_reduction <add>, %43, %cst_30 [1, 2] : vector<1x2x128xf32> to vector<1xf32>
      %45 = vector.shape_cast %44 : vector<1xf32> to vector<1x1x1xf32>
      %46 = vector.extract %45[0, 0, 0] : f32 from vector<1x1x1xf32>
      %47 = tpu.iota {dimensions = array<i32: 2>} : vector<1x8x128xi32>
      %c0_i32_31 = arith.constant 0 : i32
      %48 = vector.broadcast %c0_i32_31 : i32 to vector<1x8x128xi32>
      %49 = arith.cmpi eq, %47, %48 : vector<1x8x128xi32>
      %c1_i32 = arith.constant 1 : i32
      %50 = vector.broadcast %c1_i32 : i32 to vector<1x8x128xi32>
      %51 = arith.cmpi eq, %47, %50 : vector<1x8x128xi32>
      %cst_32 = arith.constant 0.000000e+00 : f32
      %52 = vector.broadcast %46 : f32 to vector<1x8x128xf32>
      %53 = vector.broadcast %cst_32 : f32 to vector<1x8x128xf32>
      %54 = arith.select %51, %52, %53 : vector<1x8x128xi1>, vector<1x8x128xf32>
      %55 = vector.broadcast %41 : f32 to vector<1x8x128xf32>
      %56 = arith.select %49, %55, %54 : vector<1x8x128xi1>, vector<1x8x128xf32>
      %c0_33 = arith.constant 0 : index
      %c0_34 = arith.constant 0 : index
      %c0_35 = arith.constant 0 : index
      %57 = vector.load %arg4[%c0_33, %c0_34, %c0_35] : memref<1x8x128xf32, #tpu.memory_space<vmem>>, vector<1x8x128xf32>
      tpu.vector_store %arg4[%c0_33, %c0_34, %c0_35], %56 {strides = array<i32>} : memref<1x8x128xf32, #tpu.memory_space<vmem>>, vector<1x8x128xf32>,
    } else {
    }
    return
  }
  func.func @transform_0(%arg0: i32, %arg1: i32) -> (i32, i32, i32, i32) {
    %c0_i32 = arith.constant 0 : i32
    %c0_i32_0 = arith.constant 0 : i32
    %c0_i32_1 = arith.constant 0 : i32
    return %arg0, %c0_i32, %arg1, %c0_i32_0 : i32, i32, i32, i32
  }
  func.func @transform_1(%arg0: i32, %arg1: i32) -> (i32, i32, i32) {
    %c0_i32 = arith.constant 0 : i32
    %c0_i32_0 = arith.constant 0 : i32
    return %arg0, %arg1, %c0_i32 : i32, i32, i32
  }
  func.func @transform_2(%arg0: i32, %arg1: i32) -> (i32, i32, i32) {
    %c0_i32 = arith.constant 0 : i32
    %c0_i32_0 = arith.constant 0 : i32
    %c0_i32_1 = arith.constant 0 : i32
    return %arg0, %c0_i32, %c0_i32_0 : i32, i32, i32
  }
}

</mosaic_0001>

<llo_original>
// kernel: tpu_custom_call.1
$region0: #{tpu_custom_call.1}
  #allocation0 [shape = 'u32[]', space=smem, size = 0x4, offset = 0x4, fixed_abs, tag = 'smem constant byte address 0x4 - core index']
  #allocation1 [shape = 'u32[144,128]{1,0:T(1,128)}', space=vmem, size = 0x12000, scoped, tag = 'internal scratch']
  #allocation2 [shape = 'f32[2,128]{1,0:T(2,128)}', space=vmem, size = 0x400, scoped, tag = 'scratch operand']
  #allocation3 [shape = 'f32[2,128]{1,0:T(2,128)}', space=vmem, size = 0x400, scoped, tag = 'scratch operand']
  %s0 = inlined_call_operand.hbm [shape: f32[2,2,2,128], index: 0, kind: input, shape index: {}]
  %s1 = inlined_call_operand.hbm [shape: s32[2,2,128], index: 1, kind: input, shape index: {}]
  %s2 = inlined_call_operand.hbm [shape: f32[2,8,128], index: 2, kind: output, shape index: {}]
  %s3 = sld [smem:[#allocation0]]
  $region57: #{tpu_custom_call.1} parent=0
    _
  %s5 = ssub.s32 1, %s3
  %s6 = scalar_select 0, %s5, %s3
  $region1: #{tpu_custom_call.1} parent=0
    #allocation4 [shape = 'u8[4096]{0}', space=vmem, size = 0x1000, scoped, tag = 'input window, operand 0']
    #allocation5 [shape = 's32[2]{0}', space=sflag, size = 0x8, scoped, tag = 'scoped memory for tpu_custom_call.1']
    #allocation6 [shape = 's32[2]{0}', space=sflag, size = 0x8, scoped, tag = 'scoped memory for tpu_custom_call.1']
    #allocation7 [shape = 'u8[2048]{0}', space=vmem, size = 0x800, scoped, tag = 'input window, operand 1']
    #allocation8 [shape = 's32[2]{0}', space=sflag, size = 0x8, scoped, tag = 'scoped memory for tpu_custom_call.1']
    #allocation9 [shape = 'u8[8192]{0}', space=vmem, size = 0x2000, scoped, tag = 'output window, operand 0']
    %7 = vsyncpa [#allocation5], 0
    %s8 = scalar_lea.sflag [#allocation5], 1
    %9 = vsyncpa %s8, 0
    %10 = vsyncpa [#allocation8], 0
    %s11 = scalar_lea.sflag [#allocation8], 1
    %12 = vsyncpa %s11, 0
    %13 = vsyncpa [#allocation6], 0
    %s14 = scalar_lea.sflag [#allocation6], 1
    %15 = vsyncpa %s14, 0
    loop: start=0, step=1, limit=4
    $region2: #{tpu_custom_call.1} parent=1 // loop_pre_header
      _
    $region3: #{tpu_custom_call.1} parent=1 // loop_header
      %s17 = sphi 0, %s21
      %p18 = scmp.ge.s32.totalorder %s17, 4
      %s24 = sphi 0, %s36
      %s25 = sphi 0, %s32
      %s26 = sphi 0, %s24
      %s27 = sphi 0, %s25
      %s28 = sphi 0, %s26
      %s29 = sphi 0, %s27
      %s41 = sphi 0, %s43
      %s44 = sphi 0, %s41
      %s45 = sphi 0, %s44
      %s61 = sphi 0, %s45
      %s69 = sphi 0, %s71
      %s72 = sphi 0, %s69
      %s73 = sphi 0, %s72
      %s89 = sphi 0, %s73
      %s95 = sphi 0, %s97
      %s98 = sphi 0, %s95
      %s99 = sphi 0, %s98
      %s115 = sphi 0, %s99
    $region4: #{tpu_custom_call.1} parent=1 // loop_header_branch
      %20 = sbr.rel (%p18) target = $region8
    $region5: #{tpu_custom_call.1} parent=1 // loop_body
      %s22 = ssub.s32 %s17, 1
      %s23 = ssub.s32 %s17, 2
      %s30 = sadd.s32 1, %s25
      %p31 = scmp.ge.s32.totalorder %s30, 1
      %s32 = scalar_select %p31, 0, %s30
      %s33 = sadd.s32 1, %s24
      %s34 = scalar_select %p31, %s33, %s24
      %p35 = scmp.ge.s32.totalorder %s34, 2
      %s36 = scalar_select %p35, 0, %s34
      %s37 = ssub.s32 %s24, %s36
      %s38 = ssub.s32 %s25, %s32
      %s39 = sor.u32 %s37, %s38
      %p40 = scmp.eq.s32.totalorder %s39, 0
      %s42 = sadd.s32 %s41, 1
      %s43 = scalar_select %p40, %s41, %s42
      %p46 = pneg %p40
      %p47 = scmp.eq.s32.totalorder %s17, 1
      %p48 = por %p46, %p47
      %p49 = scmp.ne.s32.totalorder %s41, %s44
      %p50 = scmp.eq.s32.totalorder %s17, 0
      %p51 = por %p49, %p50
      %p52 = scmp.ne.s32.totalorder %s41, %s44
      %p53 = scmp.eq.s32.totalorder %s22, 1
      %p54 = por %p52, %p53
      %p55 = scmp.ne.s32.totalorder %s44, %s45
      %p56 = scmp.eq.s32.totalorder %s22, 0
      %p57 = por %p55, %p56
      %p58 = scmp.ne.s32.totalorder %s44, %s45
      %p59 = scmp.eq.s32.totalorder %s23, 1
      %p60 = por %p58, %p59
      %p62 = scmp.ne.s32.totalorder %s45, %s61
      %p63 = scmp.eq.s32.totalorder %s23, 0
      %p64 = por %p62, %p63
      %s65 = ssub.s32 %s24, %s36
      %s66 = ssub.s32 %s25, %s32
      %s67 = sor.u32 %s65, %s66
      %p68 = scmp.eq.s32.totalorder %s67, 0
      %s70 = sadd.s32 %s69, 1
      %s71 = scalar_select %p68, %s69, %s70
      %p74 = pneg %p68
      %p75 = scmp.eq.s32.totalorder %s17, 1
      %p76 = por %p74, %p75
      %p77 = scmp.ne.s32.totalorder %s69, %s72
      %p78 = scmp.eq.s32.totalorder %s17, 0
      %p79 = por %p77, %p78
      %p80 = scmp.ne.s32.totalorder %s69, %s72
      %p81 = scmp.eq.s32.totalorder %s22, 1
      %p82 = por %p80, %p81
      %p83 = scmp.ne.s32.totalorder %s72, %s73
      %p84 = scmp.eq.s32.totalorder %s22, 0
      %p85 = por %p83, %p84
      %p86 = scmp.ne.s32.totalorder %s72, %s73
      %p87 = scmp.eq.s32.totalorder %s23, 1
      %p88 = por %p86, %p87
      %p90 = scmp.ne.s32.totalorder %s73, %s89
      %p91 = scmp.eq.s32.totalorder %s23, 0
      %p92 = por %p90, %p91
      %s93 = ssub.s32 %s24, %s36
      %p94 = scmp.eq.s32.totalorder %s93, 0
      %s96 = sadd.s32 %s95, 1
      %s97 = scalar_select %p94, %s95, %s96
      %p100 = pneg %p94
      %p101 = scmp.eq.s32.totalorder %s17, 1
      %p102 = por %p100, %p101
      %p103 = scmp.ne.s32.totalorder %s95, %s98
      %p104 = scmp.eq.s32.totalorder %s17, 0
      %p105 = por %p103, %p104
      %p106 = scmp.ne.s32.totalorder %s95, %s98
      %p107 = scmp.eq.s32.totalorder %s22, 1
      %p108 = por %p106, %p107
      %p109 = scmp.ne.s32.totalorder %s98, %s99
      %p110 = scmp.eq.s32.totalorder %s22, 0
      %p111 = por %p109, %p110
      %p112 = scmp.ne.s32.totalorder %s98, %s99
      %p113 = scmp.eq.s32.totalorder %s23, 1
      %p114 = por %p112, %p113
      %p116 = scmp.ne.s32.totalorder %s99, %s115
      %p117 = scmp.eq.s32.totalorder %s23, 0
      %p118 = por %p116, %p117
      %p119 = scmp.le.s32.totalorder 1, %s17
      %p120 = scmp.lt.s32.totalorder %s17, 3
      %p121 = pnand %p119, %p120
      %p122 = pneg %p121
      // Predicated region
      $region9: #{tpu_custom_call.1} parent=5 // pred_check
        _
      $region10: #{tpu_custom_call.1} parent=5 // pred_check_branch
        %124 = sbr.rel (%p121) target = $region12
      $region11: #{tpu_custom_call.1} parent=5 // pred_region
        %s125 = ssub.s32 %s17, 1
      $region12: #{tpu_custom_call.1} parent=5 // pred_fallthru
        _
      %p126 = scmp.lt.s32.totalorder %s17, 2
      // Predicated region
      $region13: #{tpu_custom_call.1} parent=5 // pred_check
        %p127 = pneg %p126
      $region14: #{tpu_custom_call.1} parent=5 // pred_check_branch
        %129 = sbr.rel (%p127) target = $region16
      $region15: #{tpu_custom_call.1} parent=5 // pred_region
        // Predicated region
        $region17: #{tpu_custom_call.1} parent=15 // pred_check
          %p130 = pneg %p51
        $region18: #{tpu_custom_call.1} parent=15 // pred_check_branch
          %132 = sbr.rel (%p130) target = $region20
        $region19: #{tpu_custom_call.1} parent=15 // pred_region
          %s133 = sand.u32 %s41, 1
          %s134 = scalar_lea.sflag [#allocation5], %s133
          %s135 = sand.u32 %s41, 1
          %s136 = smul.addr %s135, 4
          %s137 = scalar_lea.vmem [#allocation4], %s136
          %s139 = ssub.s32 64, 64
          %140 = vsyncadd %s134, %s139
          %s141 = smul.addr %s24, 2
          %s142 = sadd.s32 %s25, %s141
          %s143 = smul.addr %s142, 32
          %s144 = scalar_lea.hbm %s0, %s143
          %s145 = sshll.u32 %s137, 4
          %s146 = int_to_ptr.vmem [resolvable:$true] %s145
          %151 = dma.hbm_to_vmem [thread:$0]  %s144, 64, %s146, %s134, 32, 32, 2
        $region20: #{tpu_custom_call.1} parent=15 // pred_fallthru
          _
        // Predicated region
        $region21: #{tpu_custom_call.1} parent=15 // pred_check
          %p152 = pneg %p79
        $region22: #{tpu_custom_call.1} parent=15 // pred_check_branch
          %154 = sbr.rel (%p152) target = $region24
        $region23: #{tpu_custom_call.1} parent=15 // pred_region
          %s155 = sand.u32 %s69, 1
          %s156 = scalar_lea.sflag [#allocation8], %s155
          %s157 = sand.u32 %s69, 1
          %s158 = smul.addr %s157, 2
          %s159 = scalar_lea.vmem [#allocation7], %s158
          %s161 = ssub.s32 32, 32
          %162 = vsyncadd %s156, %s161
          %s163 = sadd.s32 %s25, %s24
          %s164 = smul.addr %s163, 32
          %s165 = scalar_lea.hbm %s1, %s164
          %s167 = sshll.u32 %s159, 4
          %s168 = int_to_ptr.vmem [resolvable:$true] %s167
          %170 = dma.hbm_to_vmem [thread:$0]  %s165, 32, %s168, %s156
        $region24: #{tpu_custom_call.1} parent=15 // pred_fallthru
          _
      $region16: #{tpu_custom_call.1} parent=5 // pred_fallthru
        _
      %p171 = scmp.le.s32.totalorder 1, %s17
      %p172 = scmp.lt.s32.totalorder %s17, 3
      %p173 = pnand %p171, %p172
      %p174 = pneg %p173
      // Predicated region
      $region25: #{tpu_custom_call.1} parent=5 // pred_check
        _
      $region26: #{tpu_custom_call.1} parent=5 // pred_check_branch
        %176 = sbr.rel (%p173) target = $region28
      $region27: #{tpu_custom_call.1} parent=5 // pred_region
        %s177 = ssub.s32 %s17, 1
        %s178 = sand.u32 %s44, 1
        %s179 = scalar_lea.sflag [#allocation5], %s178
        %s180 = sand.u32 %s44, 1
        %s181 = smul.addr %s180, 4
        %s182 = scalar_lea.vmem [#allocation4], %s181
        // Predicated region
        $region29: #{tpu_custom_call.1} parent=27 // pred_check
          %p183 = pneg %p57
        $region30: #{tpu_custom_call.1} parent=27 // pred_check_branch
          %185 = sbr.rel (%p183) target = $region32
        $region31: #{tpu_custom_call.1} parent=27 // pred_region
          %186 = dma.done %s179, 64
        $region32: #{tpu_custom_call.1} parent=27 // pred_fallthru
          _
        %s187 = sand.u32 %s72, 1
        %s188 = scalar_lea.sflag [#allocation8], %s187
        %s189 = sand.u32 %s72, 1
        %s190 = smul.addr %s189, 2
        %s191 = scalar_lea.vmem [#allocation7], %s190
        // Predicated region
        $region33: #{tpu_custom_call.1} parent=27 // pred_check
          %p192 = pneg %p85
        $region34: #{tpu_custom_call.1} parent=27 // pred_check_branch
          %194 = sbr.rel (%p192) target = $region36
        $region35: #{tpu_custom_call.1} parent=27 // pred_region
          %195 = dma.done %s188, 32
        $region36: #{tpu_custom_call.1} parent=27 // pred_fallthru
          _
        %s196 = sand.u32 %s44, 1
        %s197 = scalar_lea.sflag [#allocation5], %s196
        %s198 = sand.u32 %s44, 1
        %s199 = smul.addr %s198, 4
        %s200 = scalar_lea.vmem [#allocation4], %s199
        %p201 = pneg %p57
        %p202 = pneg %p54
        %s203 = sand.u32 %s72, 1
        %s204 = scalar_lea.sflag [#allocation8], %s203
        %s205 = sand.u32 %s72, 1
        %s206 = smul.addr %s205, 2
        %s207 = scalar_lea.vmem [#allocation7], %s206
        %p208 = pneg %p85
        %p209 = pneg %p82
        %p210 = pneg %p111
        %p211 = pneg %p108
        %s212 = sand.u32 %s98, 1
        %s213 = scalar_lea.sflag [#allocation6], %s212
        %s214 = sand.u32 %s98, 1
        %s215 = smul.addr %s214, 8
        %s216 = scalar_lea.vmem [#allocation9], %s215
        %p217 = scmp.eq.s32.totalorder %s27, 0
        // Predicated region
        $region37: #{tpu_custom_call.1} parent=27 // pred_check
          %p218 = pneg %p217
        $region38: #{tpu_custom_call.1} parent=27 // pred_check_branch
          %220 = sbr.rel (%p218) target = $region40
        $region39: #{tpu_custom_call.1} parent=27 // pred_region
          %221 = vst [vmem:[#allocation2] sm:$0x3] 0.0
          %222 = vst [vmem:[#allocation3] sm:$0x3] 0.0
        $region40: #{tpu_custom_call.1} parent=27 // pred_fallthru
          _
        %v223 = vld [vmem:[%s182] sm:$0x3]
        %s224 = scalar_lea.vmem %s182, 2 [#allocation4]
        %v225 = vld [vmem:[%s224] sm:$0x3]
        %v226 = vld [vmem:[%s191] sm:$0x3]
        %vm227 = vcmp.eq.s32.totalorder %v226, 0
        %v228 = vsub.f32 %v225, %v223
        %v229 = vsub.f32 %v223, %v225
        %v230 = vsel %vm227, %v228, %v229
        %v231 = vmax.f32 %v230, 0.0
        %v232 = vand.u32 2147483647, %v230
        %v233 = vsub.f32 0.0, %v232
        %v234 = vmul.f32 %v233, 1.442695
        %v235 = vpow.pop %v234
        %v236 = vadd.f32 %v235, 1.0
        %v237 = vlog2.pop %v236
        %v238 = vmul.f32 %v237, 0.6931472
        %v239 = vadd.f32 %v231, %v238
        %v240 = vsel %vm227, 10.0, 2.5
        %v241 = vld [vmem:[#allocation2] sm:$0x3]
        %v242 = vmul.f32 %v240, %v239
        %v243 = vadd.f32 %v241, %v242
        %244 = vst [vmem:[#allocation2] sm:$0x3] %v243
        %v245 = vld [vmem:[#allocation3] sm:$0x3]
        %v246 = vadd.f32 %v245, %v240
        %247 = vst [vmem:[#allocation3] sm:$0x3] %v246
        // Predicated region
        $region41: #{tpu_custom_call.1} parent=27 // pred_check
          %p248 = pneg %p217
        $region42: #{tpu_custom_call.1} parent=27 // pred_check_branch
          %250 = sbr.rel (%p248) target = $region44
        $region43: #{tpu_custom_call.1} parent=27 // pred_region
          %v251 = vld [vmem:[#allocation2] sm:$0x3]
          %vm252 = vcmask 1041408
          %v253 = vsel %vm252, %v251, 0.0
          %254 = vadd.xlane.f32.xlu0 %v253
          %v255 = vpop.xlane.xlu0 %254
          %v256 = vrot.slane %v255, 4
          %v257 = vadd.f32 %v255, %v256
          %v258 = vrot.slane %v257, 2
          %v259 = vadd.f32 %v257, %v258
          %v260 = vrot.slane %v259, 1
          %v261 = vadd.f32 %v259, %v260
          %s262 = vtos %v261
          %v263 = vld [vmem:[#allocation3] sm:$0x3]
          %v264 = vsel %vm252, %v263, 0.0
          %265 = vadd.xlane.f32.xlu0 %v264
          %v266 = vpop.xlane.xlu0 %265
          %v267 = vrot.slane %v266, 4
          %v268 = vadd.f32 %v266, %v267
          %v269 = vrot.slane %v268, 2
          %v270 = vadd.f32 %v268, %v269
          %v271 = vrot.slane %v270, 1
          %v272 = vadd.f32 %v270, %v271
          %s273 = vtos %v272
          %v274 = vlaneseq
          %v275 = vand.u32 %v274, 127
          %vm276 = vcmp.eq.s32.totalorder %v275, 0
          %vm277 = vcmp.eq.s32.totalorder %v275, 1
          %v278 = vstv %s273
          %v279 = vsel %vm277, %v278, 0.0
          %v280 = vstv %s262
          %v281 = vsel %vm276, %v280, %v279
          %282 = vst [vmem:[%s216] sm:$0xff] %v281
        $region44: #{tpu_custom_call.1} parent=27 // pred_fallthru
          _
        %s283 = sand.u32 %s98, 1
        %s284 = scalar_lea.sflag [#allocation6], %s283
        %s285 = sand.u32 %s98, 1
        %s286 = smul.addr %s285, 8
        %s287 = scalar_lea.vmem [#allocation9], %s286
        // Predicated region
        $region45: #{tpu_custom_call.1} parent=27 // pred_check
          %p288 = pneg %p108
        $region46: #{tpu_custom_call.1} parent=27 // pred_check_branch
          %290 = sbr.rel (%p288) target = $region48
        $region47: #{tpu_custom_call.1} parent=27 // pred_region
          %s292 = ssub.s32 128, 128
          %293 = vsyncadd %s284, %s292
          %s294 = smul.addr %s26, 128
          %s295 = scalar_lea.hbm %s2, %s294
          %s297 = sshll.u32 %s287, 4
          %s298 = int_to_ptr.vmem [resolvable:$true] %s297
          %300 = dma.vmem_to_hbm [thread:$0]  %s298, 128, %s295, %s284
        $region48: #{tpu_custom_call.1} parent=27 // pred_fallthru
          _
      $region28: #{tpu_custom_call.1} parent=5 // pred_fallthru
        _
      %p301 = scmp.le.s32.totalorder 2, %s17
      // Predicated region
      $region49: #{tpu_custom_call.1} parent=5 // pred_check
        %p302 = pneg %p301
      $region50: #{tpu_custom_call.1} parent=5 // pred_check_branch
        %304 = sbr.rel (%p302) target = $region52
      $region51: #{tpu_custom_call.1} parent=5 // pred_region
        %s305 = ssub.s32 %s17, 2
        // Predicated region
        $region53: #{tpu_custom_call.1} parent=51 // pred_check
          %p306 = pneg %p114
        $region54: #{tpu_custom_call.1} parent=51 // pred_check_branch
          %308 = sbr.rel (%p306) target = $region56
        $region55: #{tpu_custom_call.1} parent=51 // pred_region
          %s309 = sand.u32 %s99, 1
          %s310 = scalar_lea.sflag [#allocation6], %s309
          %s311 = sand.u32 %s99, 1
          %s312 = smul.addr %s311, 8
          %s313 = scalar_lea.vmem [#allocation9], %s312
          %314 = dma.done %s310, 128
        $region56: #{tpu_custom_call.1} parent=51 // pred_fallthru
          _
      $region52: #{tpu_custom_call.1} parent=5 // pred_fallthru
        _
    $region6: #{tpu_custom_call.1} parent=1 // loop_footer
      %s21 = sadd.s32 1, %s17
    $region7: #{tpu_custom_call.1} parent=1 // loop_footer_branch
      %16 = sbr.rel target = $region3
    $region8: #{tpu_custom_call.1} parent=1 // loop_exit
      _
    %315 = vsyncpa [#allocation5], 1
    %s316 = scalar_lea.sflag [#allocation5], 1
    %317 = vsyncpa %s316, 1
    %318 = vsyncpa [#allocation8], 1
    %s319 = scalar_lea.sflag [#allocation8], 1
    %320 = vsyncpa %s319, 1
    %321 = vsyncpa [#allocation6], 1
    %s322 = scalar_lea.sflag [#allocation6], 1
    %323 = vsyncpa %s322, 1

</llo_original>
